<compile_context>
chip_gen: v6e
topology: v6e:2x2x1
jax: 0.10.0
libtpu: 0.0.40
codegen_flags: <defaults>
</compile_context>

<pallas_src>
import jax
import jax.numpy as jnp
from jax.experimental import pallas as pl
from jax.experimental.pallas import tpu as pltpu


_VMEM_LIMIT = 32 * 1024 * 1024  # safe for v7x (64 MiB VMEM / 32 MiB scoped default)


def _round_up(x, m):
    return (x + m - 1) // m * m


def _pick_tile(dim, candidates):
    for c in candidates:
        if c <= dim and dim % c == 0:
            return c
    return candidates[-1]


# ----------------------------- Pallas kernels -----------------------------

def _bn_relu_kernel(x_ref, s_ref, t_ref, o_ref):
    # y = relu(x * scale + shift); scale/shift broadcast over rows
    y = x_ref[...] * s_ref[...] + t_ref[...]
    o_ref[...] = jnp.maximum(y, 0.0).astype(o_ref.dtype)


def _mm_kernel(a_ref, b_ref, o_ref, acc_ref):
    k = pl.program_id(2)

    @pl.when(k == 0)
    def _():
        acc_ref[...] = jnp.zeros_like(acc_ref)

    acc_ref[...] += jnp.dot(a_ref[...], b_ref[...],
                            preferred_element_type=jnp.float32)

    @pl.when(k == pl.num_programs(2) - 1)
    def _():
        o_ref[...] = acc_ref[...].astype(o_ref.dtype)


def _mm_bn_relu_kernel(a_ref, b_ref, s_ref, t_ref, o_ref, acc_ref):
    # matmul with BN+ReLU fused as an epilogue at the final K step
    k = pl.program_id(2)

    @pl.when(k == 0)
    def _():
        acc_ref[...] = jnp.zeros_like(acc_ref)

    acc_ref[...] += jnp.dot(a_ref[...], b_ref[...],
                            preferred_element_type=jnp.float32)

    @pl.when(k == pl.num_programs(2) - 1)
    def _():
        y = acc_ref[...] * s_ref[...] + t_ref[...]
        o_ref[...] = jnp.maximum(y, 0.0).astype(o_ref.dtype)


def _mm_add_kernel(a_ref, b_ref, r_ref, o_ref, acc_ref):
    # matmul with the residual added only at the final K step
    k = pl.program_id(2)

    @pl.when(k == 0)
    def _():
        acc_ref[...] = jnp.zeros_like(acc_ref)

    acc_ref[...] += jnp.dot(a_ref[...], b_ref[...],
                            preferred_element_type=jnp.float32)

    @pl.when(k == pl.num_programs(2) - 1)
    def _():
        o_ref[...] = (acc_ref[...]
                      + r_ref[...].astype(jnp.float32)).astype(o_ref.dtype)


# ----------------------------- Pallas wrappers -----------------------------

def bn_relu_pallas(x2d, scale, shift, *, out_dtype=jnp.bfloat16, tr_max=256):
    """x2d: (M, C) f32 with C % 128 == 0; scale/shift: (1, C) f32."""
    M, C = x2d.shape
    assert C % 128 == 0
    tr = min(tr_max, _round_up(M, 8))
    Mp = _round_up(M, tr)
    if Mp != M:
        x2d = jnp.pad(x2d, ((0, Mp - M), (0, 0)))
    out = pl.pallas_call(
        _bn_relu_kernel,
        out_shape=jax.ShapeDtypeStruct((Mp, C), out_dtype),
        grid_spec=pltpu.PrefetchScalarGridSpec(
            num_scalar_prefetch=0,
            grid=(Mp // tr,),
            in_specs=[pl.BlockSpec((tr, C), lambda i: (i, 0)),
                      pl.BlockSpec((1, C), lambda i: (0, 0)),
                      pl.BlockSpec((1, C), lambda i: (0, 0))],
            out_specs=pl.BlockSpec((tr, C), lambda i: (i, 0))),
        compiler_params=pltpu.CompilerParams(
            dimension_semantics=("parallel",),
            vmem_limit_bytes=_VMEM_LIMIT),
    )(x2d, scale, shift)
    return out[:M] if Mp != M else out


def tiled_matmul(a, b, *, scale=None, shift=None, residual=None,
                 out_dtype=jnp.float32, tm_max=256):
    """(M, K) @ (K, N) with K, N multiples of 128 (lane-dense tiles).

    Optional fused epilogues at the last K step:
      * scale/shift: y = relu(y * scale + shift)
      * residual:    y = y + residual
    A/B are expected in bf16; accumulation is f32 in a VMEM scratch.
    """
    M, K = a.shape
    K2, N = b.shape
    assert K == K2 and K % 128 == 0 and N % 128 == 0

    tm = min(tm_max, _round_up(M, 8))
    Mp = _round_up(M, tm)
    tn = _pick_tile(N, (256, 128))
    tk = _pick_tile(K, (512, 384, 256, 128))

    if Mp != M:
        a = jnp.pad(a, ((0, Mp - M), (0, 0)))
        if residual is not None:
            residual = jnp.pad(residual, ((0, Mp - M), (0, 0)))

    grid = (Mp // tm, N // tn, K // tk)
    a_spec = pl.BlockSpec((tm, tk), lambda i, j, k: (i, k))
    b_spec = pl.BlockSpec((tk, tn), lambda i, j, k: (k, j))
    o_spec = pl.BlockSpec((tm, tn), lambda i, j, k: (i, j))

    in_specs = [a_spec, b_spec]
    operands = [a, b]
    if scale is not None:
        vec_spec = pl.BlockSpec((1, tn), lambda i, j, k: (0, j))
        in_specs += [vec_spec, vec_spec]
        operands += [scale, shift]
        kernel = _mm_bn_relu_kernel
    elif residual is not None:
        in_specs += [o_spec]          # resident across K; read only at last step
        operands += [residual]
        kernel = _mm_add_kernel
    else:
        kernel = _mm_kernel

    out = pl.pallas_call(
        kernel,
        out_shape=jax.ShapeDtypeStruct((Mp, N), out_dtype),
        grid_spec=pltpu.PrefetchScalarGridSpec(
            num_scalar_prefetch=0,
            grid=grid,
            in_specs=in_specs,
            out_specs=o_spec,
            scratch_shapes=[pltpu.VMEM((tm, tn), jnp.float32)]),
        compiler_params=pltpu.CompilerParams(
            dimension_semantics=("parallel", "parallel", "arbitrary"),
            vmem_limit_bytes=_VMEM_LIMIT),
    )(*operands)
    return out[:M] if Mp != M else out


# ------------------------------- JAX glue ----------------------------------

def _bn_scale_shift(bn, c_pad):
    gamma, beta, mean, var, eps = bn
    scale = gamma / jnp.sqrt(var + eps)
    shift = beta - mean * scale
    c = scale.shape[0]
    scale = jnp.pad(scale, (0, c_pad - c)).reshape(1, c_pad).astype(jnp.float32)
    shift = jnp.pad(shift, (0, c_pad - c)).reshape(1, c_pad).astype(jnp.float32)
    return scale, shift


def _im2col_3x3(x_nhwc, stride):
    """3x3, padding=1. Returns ((N*Hp*Wp, 9*C), (N, Hp, Wp)); keeps input dtype."""
    N, H, W, C = x_nhwc.shape
    Hp = (H + 2 - 3) // stride + 1
    Wp = (W + 2 - 3) // stride + 1
    xp = jnp.pad(x_nhwc, ((0, 0), (1, 1), (1, 1), (0, 0)))
    taps = []
    for dy in range(3):
        for dx in range(3):
            taps.append(xp[:, dy:dy + stride * (Hp - 1) + 1:stride,
                           dx:dx + stride * (Wp - 1) + 1:stride, :])
    cols = jnp.stack(taps, axis=-2)                      # (N, Hp, Wp, 9, C)
    return cols.reshape(N * Hp * Wp, 9 * C), (N, Hp, Wp)


def _prep_w3x3(w_oihw, cin_p, cout_p):
    """(Cout, Cin, 3, 3) -> (9*cin_p, cout_p) bf16, zero-padded channels."""
    cout, cin = w_oihw.shape[0], w_oihw.shape[1]
    w = jnp.transpose(w_oihw, (2, 3, 1, 0))              # (3, 3, cin, cout)
    w = jnp.pad(w, ((0, 0), (0, 0), (0, cin_p - cin), (0, cout_p - cout)))
    return w.reshape(9 * cin_p, cout_p).astype(jnp.bfloat16)


def basic_block_forward(x_nchw, params, stride):
    """Pallas-backed forward. Input/output are NCHW float32."""
    cin = params["conv1"].shape[1]
    cout = params["conv1"].shape[0]
    equal_in_out = (cin == cout)
    cin_p = _round_up(cin, 128)                          # lane-dense channel pad
    cout_p = _round_up(cout, 128)

    x = jnp.transpose(x_nchw, (0, 2, 3, 1))              # NHWC, f32
    N, H, W, _ = x.shape
    x_p = jnp.pad(x, ((0, 0), (0, 0), (0, 0), (0, cin_p - cin)))

    # bn1 + relu1: tiled, pipelined elementwise kernel -> bf16, channel padded
    s1, t1 = _bn_scale_shift(params["bn1"], cin_p)
    a = bn_relu_pallas(x_p.reshape(N * H * W, cin_p), s1, t1)
    a = a.reshape(N, H, W, cin_p)

    # conv1: 3x3 / stride / pad 1, with bn2 + relu2 fused into matmul epilogue
    cols1, (_, Hp, Wp) = _im2col_3x3(a, stride)          # bf16 (M1, 9*cin_p)
    w1 = _prep_w3x3(params["conv1"], cin_p, cout_p)
    s2, t2 = _bn_scale_shift(params["bn2"], cout_p)
    M1 = N * Hp * Wp
    o = tiled_matmul(cols1, w1, scale=s2, shift=t2, out_dtype=jnp.bfloat16)
    o = o.reshape(N, Hp, Wp, cout_p)

    # droprate = 0.0 -> no dropout

    # shortcut (residual), kept in f32
    if equal_in_out:
        # identity shortcut; PyTorch semantics require stride == 1 here
        # (strided slice is a graceful guard if stride > 1 is ever passed).
        shortcut = x_p[:, ::stride, ::stride, :].reshape(M1, cout_p)
    else:
        # convShortcut: 1x1, stride, applied to relu(bn1(x))
        xs = a[:, ::stride, ::stride, :].reshape(M1, cin_p)
        ws = jnp.transpose(params["convShortcut"][:, :, 0, 0], (1, 0))
        ws = jnp.pad(ws, ((0, cin_p - cin), (0, cout_p - cout))).astype(jnp.bfloat16)
        shortcut = tiled_matmul(xs, ws, out_dtype=jnp.float32)

    # conv2: 3x3 / 1 / pad 1, residual add fused at the last K step
    cols2, _ = _im2col_3x3(o, 1)                         # bf16 (M1, 9*cout_p)
    w2 = _prep_w3x3(params["conv2"], cout_p, cout_p)
    out2d = tiled_matmul(cols2, w2, residual=shortcut, out_dtype=jnp.float32)

    out = out2d[:, :cout].reshape(N, Hp, Wp, cout)
    return jnp.transpose(out, (0, 3, 1, 2))              # back to NCHW


# --------------------------- reference (pure JAX) ---------------------------

def ref_forward(x, p, stride):
    cin = p["conv1"].shape[1]
    cout = p["conv1"].shape[0]
    equal_in_out = (cin == cout)

    def bn_relu(x, bn):
        g, b, m, v, eps = bn
        y = ((x - m[None, :, None, None])
             * (g / jnp.sqrt(v + eps))[None, :, None, None]
             + b[None, :, None, None])
        return jnp.maximum(y, 0.0)

    dn = ("NCHW", "OIHW", "NCHW")
    a = bn_relu(x, p["bn1"])
    out = jax.lax.conv_general_dilated(a, p["conv1"], (stride, stride),
                                       ((1, 1), (1, 1)), dimension_numbers=dn)
    out = bn_relu(out, p["bn2"])
    out = jax.lax.conv_general_dilated(out, p["conv2"], (1, 1),
                                       ((1, 1), (1, 1)), dimension_numbers=dn)
    if equal_in_out:
        return x + out
    sc = jax.lax.conv_general_dilated(a, p["convShortcut"], (stride, stride),
                                      ((0, 0), (0, 0)), dimension_numbers=dn)
    return sc + out


# ------------------------------ param setup ---------------------------------

def init_params(key, cin, cout):
    ks = jax.random.split(key, 11)

    def bn(kg, kb, km, kv, c):
        gamma = jax.random.uniform(kg, (c,), minval=0.5, maxval=1.5)
        beta = 0.1 * jax.random.normal(kb, (c,))
        mean = 0.1 * jax.random.normal(km, (c,))
        var = jax.random.uniform(kv, (c,), minval=0.5, maxval=1.5)
        return (gamma.astype(jnp.float32), beta.astype(jnp.float32),
                mean.astype(jnp.float32), var.astype(jnp.float32), 1e-5)

    p = {
        "bn1": bn(ks[0], ks[1], ks[2], ks[3], cin),
        "conv1": (0.1 * jax.random.normal(ks[4], (cout, cin, 3, 3))).astype(jnp.float32),
        "bn2": bn(ks[5], ks[6], ks[7], ks[8], cout),
        "conv2": (0.1 * jax.random.normal(ks[9], (cout, cout, 3, 3))).astype(jnp.float32),
    }
    if cin != cout:
        p["convShortcut"] = (0.1 * jax.random.normal(ks[10], (cout, cin, 1, 1))).astype(jnp.float32)
    return p


# ---------------------------------- main ------------------------------------

if __name__ == "__main__":
    key = jax.random.PRNGKey(0)
    k_x1, k_p1, k_x2, k_p2 = jax.random.split(key, 4)

    # Case 1: in_planes != out_planes, stride=2 (uses convShortcut path)
    x1 = jax.random.normal(k_x1, (2, 4, 16, 16), dtype=jnp.float32)
    p1 = init_params(k_p1, cin=4, cout=8)
    out1 = jax.block_until_ready(basic_block_forward(x1, p1, stride=2))
    ref1 = jax.block_until_ready(ref_forward(x1, p1, stride=2))
    assert out1.shape == (2, 8, 8, 8), out1.shape
    assert jnp.allclose(out1, ref1, rtol=2e-2, atol=2e-2), \
        float(jnp.max(jnp.abs(out1 - ref1)))

    # Case 2: in_planes == out_planes, stride=1 (identity shortcut path)
    x2 = jax.random.normal(k_x2, (2, 4, 16, 16), dtype=jnp.float32)
    p2 = init_params(k_p2, cin=4, cout=4)
    out2 = jax.block_until_ready(basic_block_forward(x2, p2, stride=1))
    ref2 = jax.block_until_ready(ref_forward(x2, p2, stride=1))
    assert out2.shape == (2, 4, 16, 16), out2.shape
    assert jnp.allclose(out2, ref2, rtol=2e-2, atol=2e-2), \
        float(jnp.max(jnp.abs(out2 - ref2)))

    print("KERNEL_OK")
</pallas_src>

<mosaic_0001>
module attributes {stable_mosaic.version = 11 : i64} {
  func.func @_bn_relu_kernel(%arg0: i32, %arg1: memref<256x128xf32, #tpu.memory_space<vmem>>, %arg2: memref<1x128xf32, #tpu.memory_space<vmem>>, %arg3: memref<1x128xf32, #tpu.memory_space<vmem>>, %arg4: memref<256x128xbf16, #tpu.memory_space<vmem>>) attributes {dimension_semantics = [#tpu.dimension_semantics<parallel>], iteration_bounds = array<i64: 2>, scalar_prefetch = 0 : i64, scratch_operands = 0 : i64, tpu.core_type = #tpu.core_type<tc>, window_params = [{transform_indices = @transform_0, window_bounds = array<i64: 256, 128>}, {pipeline_mode = #tpu.pipeline_mode<synchronous>, transform_indices = @transform_1, window_bounds = array<i64: 1, 128>}, {pipeline_mode = #tpu.pipeline_mode<synchronous>, transform_indices = @transform_2, window_bounds = array<i64: 1, 128>}, {transform_indices = @transform_3, window_bounds = array<i64: 256, 128>}]} {
    %c0 = arith.constant 0 : index
    %c0_0 = arith.constant 0 : index
    %0 = vector.load %arg1[%c0, %c0_0] : memref<256x128xf32, #tpu.memory_space<vmem>>, vector<256x128xf32>
    %c0_1 = arith.constant 0 : index
    %c0_2 = arith.constant 0 : index
    %1 = vector.load %arg2[%c0_1, %c0_2] : memref<1x128xf32, #tpu.memory_space<vmem>>, vector<1x128xf32>
    %2 = vector.broadcast %1 : vector<1x128xf32> to vector<256x128xf32>
    %3 = arith.mulf %0, %2 : vector<256x128xf32>
    %c0_3 = arith.constant 0 : index
    %c0_4 = arith.constant 0 : index
    %4 = vector.load %arg3[%c0_3, %c0_4] : memref<1x128xf32, #tpu.memory_space<vmem>>, vector<1x128xf32>
    %5 = vector.broadcast %4 : vector<1x128xf32> to vector<256x128xf32>
    %6 = arith.addf %3, %5 : vector<256x128xf32>
    %cst = arith.constant 0.000000e+00 : f32
    %7 = vector.broadcast %cst : f32 to vector<256x128xf32>
    %8 = arith.maximumf %6, %7 : vector<256x128xf32>
    %9 = arith.truncf %8 : vector<256x128xf32> to vector<256x128xbf16>
    %c0_5 = arith.constant 0 : index
    %c0_6 = arith.constant 0 : index
    %10 = vector.load %arg4[%c0_5, %c0_6] : memref<256x128xbf16, #tpu.memory_space<vmem>>, vector<256x128xbf16>
    tpu.vector_store %arg4[%c0_5, %c0_6], %9 {strides = array<i32>} : memref<256x128xbf16, #tpu.memory_space<vmem>>, vector<256x128xbf16>,
    return
  }
  func.func @transform_0(%arg0: i32) -> (i32, i32) {
    %c0_i32 = arith.constant 0 : i32
    %c0_i32_0 = arith.constant 0 : i32
    return %arg0, %c0_i32 : i32, i32
  }
  func.func @transform_1(%arg0: i32) -> (i32, i32) {
    %c0_i32 = arith.constant 0 : i32
    %c0_i32_0 = arith.constant 0 : i32
    %c0_i32_1 = arith.constant 0 : i32
    return %c0_i32, %c0_i32_0 : i32, i32
  }
  func.func @transform_2(%arg0: i32) -> (i32, i32) {
    %c0_i32 = arith.constant 0 : i32
    %c0_i32_0 = arith.constant 0 : i32
    %c0_i32_1 = arith.constant 0 : i32
    return %c0_i32, %c0_i32_0 : i32, i32
  }
  func.func @transform_3(%arg0: i32) -> (i32, i32) {
    %c0_i32 = arith.constant 0 : i32
    %c0_i32_0 = arith.constant 0 : i32
    return %arg0, %c0_i32 : i32, i32
  }
}

</mosaic_0001>

<llo_original>
// kernel: tpu_custom_call.1
$region0: #{tpu_custom_call.1}
  #allocation0 [shape = 'u32[]', space=smem, size = 0x4, offset = 0x4, fixed_abs, tag = 'smem constant byte address 0x4 - core index']
  #allocation1 [shape = 'u32[144,128]{1,0:T(1,128)}', space=vmem, size = 0x12000, scoped, tag = 'internal scratch']
  %s0 = inlined_call_operand.hbm [shape: f32[512,128], index: 0, kind: input, shape index: {}]
  %s1 = inlined_call_operand.vmem [shape: f32[1,128], index: 1, kind: input, shape index: {}]
  %s2 = inlined_call_operand.vmem [shape: f32[1,128], index: 2, kind: input, shape index: {}]
  %s3 = inlined_call_operand.hbm [shape: bf16[512,128], index: 3, kind: output, shape index: {}]
  %s4 = sld [smem:[#allocation0]]
  $region49: #{tpu_custom_call.1} parent=0
    _
  %s6 = ssub.s32 1, %s4
  %s7 = scalar_select 0, %s6, %s4
  $region1: #{tpu_custom_call.1} parent=0
    #allocation2 [shape = 'u8[262144]{0}', space=vmem, size = 0x40000, scoped, tag = 'input window, operand 0']
    #allocation3 [shape = 's32[2]{0}', space=sflag, size = 0x8, scoped, tag = 'scoped memory for tpu_custom_call.1']
    #allocation4 [shape = 's32[2]{0}', space=sflag, size = 0x8, scoped, tag = 'scoped memory for tpu_custom_call.1']
    #allocation5 [shape = 'u8[131072]{0}', space=vmem, size = 0x20000, scoped, tag = 'output window, operand 0']
    %8 = vsyncpa [#allocation3], 0
    %s9 = scalar_lea.sflag [#allocation3], 1
    %10 = vsyncpa %s9, 0
    %11 = vsyncpa [#allocation4], 0
    %s12 = scalar_lea.sflag [#allocation4], 1
    %13 = vsyncpa %s12, 0
    loop: start=0, step=1, limit=4
    $region2: #{tpu_custom_call.1} parent=1 // loop_pre_header
      _
    $region3: #{tpu_custom_call.1} parent=1 // loop_header
      %s15 = sphi 0, %s19
      %p16 = scmp.ge.s32.totalorder %s15, 4
      %s25 = sphi 0, %s27
      %s28 = sphi 0, %s25
      %s29 = sphi 0, %s28
      %s45 = sphi 0, %s29
      %s49 = sphi 0, %s49
      %s51 = sphi 0, %s49
      %s52 = sphi 0, %s51
      %s66 = sphi 0, %s52
      %s70 = sphi 0, %s70
      %s72 = sphi 0, %s70
      %s73 = sphi 0, %s72
      %s87 = sphi 0, %s73
      %s93 = sphi 0, %s95
      %s96 = sphi 0, %s93
      %s97 = sphi 0, %s96
      %s113 = sphi 0, %s97
    $region4: #{tpu_custom_call.1} parent=1 // loop_header_branch
      %18 = sbr.rel (%p16) target = $region8
    $region5: #{tpu_custom_call.1} parent=1 // loop_body
      %s20 = ssub.s32 %s15, 1
      %s21 = ssub.s32 %s15, 2
      %s22 = sadd.s32 %s15, 1
      %s23 = ssub.s32 %s15, %s22
      %p24 = scmp.eq.s32.totalorder %s23, 0
      %s26 = sadd.s32 %s25, 1
      %s27 = scalar_select %p24, %s25, %s26
      %p30 = pneg %p24
      %p31 = scmp.eq.s32.totalorder %s15, 1
      %p32 = por %p30, %p31
      %p33 = scmp.ne.s32.totalorder %s25, %s28
      %p34 = scmp.eq.s32.totalorder %s15, 0
      %p35 = por %p33, %p34
      %p36 = scmp.ne.s32.totalorder %s25, %s28
      %p37 = scmp.eq.s32.totalorder %s20, 1
      %p38 = por %p36, %p37
      %p39 = scmp.ne.s32.totalorder %s28, %s29
      %p40 = scmp.eq.s32.totalorder %s20, 0
      %p41 = por %p39, %p40
      %p42 = scmp.ne.s32.totalorder %s28, %s29
      %p43 = scmp.eq.s32.totalorder %s21, 1
      %p44 = por %p42, %p43
      %p46 = scmp.ne.s32.totalorder %s29, %s45
      %p47 = scmp.eq.s32.totalorder %s21, 0
      %p48 = por %p46, %p47
      %s50 = sadd.s32 %s49, 1
      %p53 = scmp.eq.s32.totalorder %s15, 1
      %p54 = scmp.ne.s32.totalorder %s49, %s51
      %p55 = scmp.eq.s32.totalorder %s15, 0
      %p56 = por %p54, %p55
      %p57 = scmp.ne.s32.totalorder %s49, %s51
      %p58 = scmp.eq.s32.totalorder %s20, 1
      %p59 = por %p57, %p58
      %p60 = scmp.ne.s32.totalorder %s51, %s52
      %p61 = scmp.eq.s32.totalorder %s20, 0
      %p62 = por %p60, %p61
      %p63 = scmp.ne.s32.totalorder %s51, %s52
      %p64 = scmp.eq.s32.totalorder %s21, 1
      %p65 = por %p63, %p64
      %p67 = scmp.ne.s32.totalorder %s52, %s66
      %p68 = scmp.eq.s32.totalorder %s21, 0
      %p69 = por %p67, %p68
      %s71 = sadd.s32 %s70, 1
      %p74 = scmp.eq.s32.totalorder %s15, 1
      %p75 = scmp.ne.s32.totalorder %s70, %s72
      %p76 = scmp.eq.s32.totalorder %s15, 0
      %p77 = por %p75, %p76
      %p78 = scmp.ne.s32.totalorder %s70, %s72
      %p79 = scmp.eq.s32.totalorder %s20, 1
      %p80 = por %p78, %p79
      %p81 = scmp.ne.s32.totalorder %s72, %s73
      %p82 = scmp.eq.s32.totalorder %s20, 0
      %p83 = por %p81, %p82
      %p84 = scmp.ne.s32.totalorder %s72, %s73
      %p85 = scmp.eq.s32.totalorder %s21, 1
      %p86 = por %p84, %p85
      %p88 = scmp.ne.s32.totalorder %s73, %s87
      %p89 = scmp.eq.s32.totalorder %s21, 0
      %p90 = por %p88, %p89
      %s91 = ssub.s32 %s15, %s22
      %p92 = scmp.eq.s32.totalorder %s91, 0
      %s94 = sadd.s32 %s93, 1
      %s95 = scalar_select %p92, %s93, %s94
      %p98 = pneg %p92
      %p99 = scmp.eq.s32.totalorder %s15, 1
      %p100 = por %p98, %p99
      %p101 = scmp.ne.s32.totalorder %s93, %s96
      %p102 = scmp.eq.s32.totalorder %s15, 0
      %p103 = por %p101, %p102
      %p104 = scmp.ne.s32.totalorder %s93, %s96
      %p105 = scmp.eq.s32.totalorder %s20, 1
      %p106 = por %p104, %p105
      %p107 = scmp.ne.s32.totalorder %s96, %s97
      %p108 = scmp.eq.s32.totalorder %s20, 0
      %p109 = por %p107, %p108
      %p110 = scmp.ne.s32.totalorder %s96, %s97
      %p111 = scmp.eq.s32.totalorder %s21, 1
      %p112 = por %p110, %p111
      %p114 = scmp.ne.s32.totalorder %s97, %s113
      %p115 = scmp.eq.s32.totalorder %s21, 0
      %p116 = por %p114, %p115
      %p117 = scmp.le.s32.totalorder 1, %s15
      %p118 = scmp.lt.s32.totalorder %s15, 3
      %p119 = pnand %p117, %p118
      %p120 = pneg %p119
      // Predicated region
      $region9: #{tpu_custom_call.1} parent=5 // pred_check
        _
      $region10: #{tpu_custom_call.1} parent=5 // pred_check_branch
        %122 = sbr.rel (%p119) target = $region12
      $region11: #{tpu_custom_call.1} parent=5 // pred_region
        %s123 = ssub.s32 %s15, 1
        // Predicated region
        $region13: #{tpu_custom_call.1} parent=11 // pred_check
          %p124 = pneg %p62
        $region14: #{tpu_custom_call.1} parent=11 // pred_check_branch
          %126 = sbr.rel (%p124) target = $region16
        $region15: #{tpu_custom_call.1} parent=11 // pred_region
          _
        $region16: #{tpu_custom_call.1} parent=11 // pred_fallthru
          _
        // Predicated region
        $region17: #{tpu_custom_call.1} parent=11 // pred_check
          %p127 = pneg %p83
        $region18: #{tpu_custom_call.1} parent=11 // pred_check_branch
          %129 = sbr.rel (%p127) target = $region20
        $region19: #{tpu_custom_call.1} parent=11 // pred_region
          _
        $region20: #{tpu_custom_call.1} parent=11 // pred_fallthru
          _
      $region12: #{tpu_custom_call.1} parent=5 // pred_fallthru
        _
      %p130 = scmp.lt.s32.totalorder %s15, 2
      // Predicated region
      $region21: #{tpu_custom_call.1} parent=5 // pred_check
        %p131 = pneg %p130
      $region22: #{tpu_custom_call.1} parent=5 // pred_check_branch
        %133 = sbr.rel (%p131) target = $region24
      $region23: #{tpu_custom_call.1} parent=5 // pred_region
        // Predicated region
        $region25: #{tpu_custom_call.1} parent=23 // pred_check
          %p134 = pneg %p35
        $region26: #{tpu_custom_call.1} parent=23 // pred_check_branch
          %136 = sbr.rel (%p134) target = $region28
        $region27: #{tpu_custom_call.1} parent=23 // pred_region
          %s137 = sand.u32 %s25, 1
          %s138 = scalar_lea.sflag [#allocation3], %s137
          %s139 = sand.u32 %s25, 1
          %s140 = smul.addr %s139, 256
          %s141 = scalar_lea.vmem [#allocation2], %s140
          %s142 = smul.u32 32, %s15
          %s144 = ssub.s32 4096, 4096
          %145 = vsyncadd %s138, %s144
          %s146 = smul.addr %s142, 128
          %s147 = scalar_lea.hbm %s0, %s146
          %s148 = sshll.u32 %s141, 4
          %s149 = int_to_ptr.vmem [resolvable:$true] %s148
          %154 = dma.hbm_to_vmem [thread:$0]  %s147, 4096, %s149, %s138, 128, 128, 8
        $region28: #{tpu_custom_call.1} parent=23 // pred_fallthru
          _
      $region24: #{tpu_custom_call.1} parent=5 // pred_fallthru
        _
      %p155 = scmp.le.s32.totalorder 1, %s15
      %p156 = scmp.lt.s32.totalorder %s15, 3
      %p157 = pnand %p155, %p156
      %p158 = pneg %p157
      // Predicated region
      $region29: #{tpu_custom_call.1} parent=5 // pred_check
        _
      $region30: #{tpu_custom_call.1} parent=5 // pred_check_branch
        %160 = sbr.rel (%p157) target = $region32
      $region31: #{tpu_custom_call.1} parent=5 // pred_region
        %s161 = ssub.s32 %s15, 1
        %s162 = sand.u32 %s28, 1
        %s163 = scalar_lea.sflag [#allocation3], %s162
        %s164 = sand.u32 %s28, 1
        %s165 = smul.addr %s164, 256
        %s166 = scalar_lea.vmem [#allocation2], %s165
        // Predicated region
        $region33: #{tpu_custom_call.1} parent=31 // pred_check
          %p167 = pneg %p41
        $region34: #{tpu_custom_call.1} parent=31 // pred_check_branch
          %169 = sbr.rel (%p167) target = $region36
        $region35: #{tpu_custom_call.1} parent=31 // pred_region
          %170 = dma.done %s163, 4096
        $region36: #{tpu_custom_call.1} parent=31 // pred_fallthru
          _
        %s171 = sand.u32 %s28, 1
        %s172 = scalar_lea.sflag [#allocation3], %s171
        %s173 = sand.u32 %s28, 1
        %s174 = smul.addr %s173, 256
        %s175 = scalar_lea.vmem [#allocation2], %s174
        %p176 = pneg %p41
        %p177 = pneg %p38
        %p178 = pneg %p62
        %p179 = pneg %p59
        %p180 = pneg %p83
        %p181 = pneg %p80
        %p182 = pneg %p109
        %p183 = pneg %p106
        %s184 = sand.u32 %s96, 1
        %s185 = scalar_lea.sflag [#allocation4], %s184
        %s186 = sand.u32 %s96, 1
        %s187 = smul.addr %s186, 128
        %s188 = scalar_lea.vmem [#allocation5], %s187
        %s189 = smul.u32 32, %s20
        %s190 = smul.u32 32, %s20
        %v191 = vld [vmem:[%s166] sm:$0xff]
        %v192 = vld [vmem:[%s166 + $0x8] sm:$0xff]
        %v193 = vld [vmem:[%s166 + $0x10] sm:$0xff]
        %v194 = vld [vmem:[%s166 + $0x18] sm:$0xff]
        %v195 = vld [vmem:[%s166 + $0x20] sm:$0xff]
        %v196 = vld [vmem:[%s166 + $0x28] sm:$0xff]
        %v197 = vld [vmem:[%s166 + $0x30] sm:$0xff]
        %v198 = vld [vmem:[%s166 + $0x38] sm:$0xff]
        %v199 = vld [vmem:[%s166 + $0x40] sm:$0xff]
        %v200 = vld [vmem:[%s166 + $0x48] sm:$0xff]
        %v201 = vld [vmem:[%s166 + $0x50] sm:$0xff]
        %v202 = vld [vmem:[%s166 + $0x58] sm:$0xff]
        %v203 = vld [vmem:[%s166 + $0x60] sm:$0xff]
        %v204 = vld [vmem:[%s166 + $0x68] sm:$0xff]
        %v205 = vld [vmem:[%s166 + $0x70] sm:$0xff]
        %v206 = vld [vmem:[%s166 + $0x78] sm:$0xff]
        %v207 = vld [vmem:[%s166 + $0x80] sm:$0xff]
        %v208 = vld [vmem:[%s166 + $0x88] sm:$0xff]
        %v209 = vld [vmem:[%s166 + $0x90] sm:$0xff]
        %v210 = vld [vmem:[%s166 + $0x98] sm:$0xff]
        %v211 = vld [vmem:[%s166 + $0xa0] sm:$0xff]
        %v212 = vld [vmem:[%s166 + $0xa8] sm:$0xff]
        %v213 = vld [vmem:[%s166 + $0xb0] sm:$0xff]
        %v214 = vld [vmem:[%s166 + $0xb8] sm:$0xff]
        %v215 = vld [vmem:[%s166 + $0xc0] sm:$0xff]
        %v216 = vld [vmem:[%s166 + $0xc8] sm:$0xff]
        %v217 = vld [vmem:[%s166 + $0xd0] sm:$0xff]
        %v218 = vld [vmem:[%s166 + $0xd8] sm:$0xff]
        %v219 = vld [vmem:[%s166 + $0xe0] sm:$0xff]
        %v220 = vld [vmem:[%s166 + $0xe8] sm:$0xff]
        %v221 = vld [vmem:[%s166 + $0xf0] sm:$0xff]
        %v222 = vld [vmem:[%s166 + $0xf8] sm:$0xff]
        %v223 = vld [vmem:[%s1] sm:$0x1]
        %v225 = vlaneseq
        %v226 = vshrl.u32 %v225, 7
        %v227 = vsub.s32 0, %v226
        %v228 = vrot.slane %v223, %v227
        %v230 = vmul.f32 %v191, %v228
        %v231 = vmul.f32 %v192, %v228
        %v232 = vmul.f32 %v193, %v228
        %v233 = vmul.f32 %v194, %v228
        %v234 = vmul.f32 %v195, %v228
        %v235 = vmul.f32 %v196, %v228
        %v236 = vmul.f32 %v197, %v228
        %v237 = vmul.f32 %v198, %v228
        %v238 = vmul.f32 %v199, %v228
        %v239 = vmul.f32 %v200, %v228
        %v240 = vmul.f32 %v201, %v228
        %v241 = vmul.f32 %v202, %v228
        %v242 = vmul.f32 %v203, %v228
        %v243 = vmul.f32 %v204, %v228
        %v244 = vmul.f32 %v205, %v228
        %v245 = vmul.f32 %v206, %v228
        %v246 = vmul.f32 %v207, %v228
        %v247 = vmul.f32 %v208, %v228
        %v248 = vmul.f32 %v209, %v228
        %v249 = vmul.f32 %v210, %v228
        %v250 = vmul.f32 %v211, %v228
        %v251 = vmul.f32 %v212, %v228
        %v252 = vmul.f32 %v213, %v228
        %v253 = vmul.f32 %v214, %v228
        %v254 = vmul.f32 %v215, %v228
        %v255 = vmul.f32 %v216, %v228
        %v256 = vmul.f32 %v217, %v228
        %v257 = vmul.f32 %v218, %v228
        %v258 = vmul.f32 %v219, %v228
        %v259 = vmul.f32 %v220, %v228
        %v260 = vmul.f32 %v221, %v228
        %v261 = vmul.f32 %v222, %v228
        %v262 = vld [vmem:[%s2] sm:$0x1]
        %v264 = vlaneseq
        %v265 = vshrl.u32 %v264, 7
        %v266 = vsub.s32 0, %v265
        %v267 = vrot.slane %v262, %v266
        %v269 = vadd.f32 %v230, %v267
        %v270 = vadd.f32 %v231, %v267
        %v271 = vadd.f32 %v232, %v267
        %v272 = vadd.f32 %v233, %v267
        %v273 = vadd.f32 %v234, %v267
        %v274 = vadd.f32 %v235, %v267
        %v275 = vadd.f32 %v236, %v267
        %v276 = vadd.f32 %v237, %v267
        %v277 = vadd.f32 %v238, %v267
        %v278 = vadd.f32 %v239, %v267
        %v279 = vadd.f32 %v240, %v267
        %v280 = vadd.f32 %v241, %v267
        %v281 = vadd.f32 %v242, %v267
        %v282 = vadd.f32 %v243, %v267
        %v283 = vadd.f32 %v244, %v267
        %v284 = vadd.f32 %v245, %v267
        %v285 = vadd.f32 %v246, %v267
        %v286 = vadd.f32 %v247, %v267
        %v287 = vadd.f32 %v248, %v267
        %v288 = vadd.f32 %v249, %v267
        %v289 = vadd.f32 %v250, %v267
        %v290 = vadd.f32 %v251, %v267
        %v291 = vadd.f32 %v252, %v267
        %v292 = vadd.f32 %v253, %v267
        %v293 = vadd.f32 %v254, %v267
        %v294 = vadd.f32 %v255, %v267
        %v295 = vadd.f32 %v256, %v267
        %v296 = vadd.f32 %v257, %v267
        %v297 = vadd.f32 %v258, %v267
        %v298 = vadd.f32 %v259, %v267
        %v299 = vadd.f32 %v260, %v267
        %v300 = vadd.f32 %v261, %v267
        %v301 = vmax.f32 %v269, 0.0
        %v302 = vmax.f32 %v270, 0.0
        %v303 = vmax.f32 %v271, 0.0
        %v304 = vmax.f32 %v272, 0.0
        %v305 = vmax.f32 %v273, 0.0
        %v306 = vmax.f32 %v274, 0.0
        %v307 = vmax.f32 %v275, 0.0
        %v308 = vmax.f32 %v276, 0.0
        %v309 = vmax.f32 %v277, 0.0
        %v310 = vmax.f32 %v278, 0.0
        %v311 = vmax.f32 %v279, 0.0
        %v312 = vmax.f32 %v280, 0.0
        %v313 = vmax.f32 %v281, 0.0
        %v314 = vmax.f32 %v282, 0.0
        %v315 = vmax.f32 %v283, 0.0
        %v316 = vmax.f32 %v284, 0.0
        %v317 = vmax.f32 %v285, 0.0
        %v318 = vmax.f32 %v286, 0.0
        %v319 = vmax.f32 %v287, 0.0
        %v320 = vmax.f32 %v288, 0.0
        %v321 = vmax.f32 %v289, 0.0
        %v322 = vmax.f32 %v290, 0.0
        %v323 = vmax.f32 %v291, 0.0
        %v324 = vmax.f32 %v292, 0.0
        %v325 = vmax.f32 %v293, 0.0
        %v326 = vmax.f32 %v294, 0.0
        %v327 = vmax.f32 %v295, 0.0
        %v328 = vmax.f32 %v296, 0.0
        %v329 = vmax.f32 %v297, 0.0
        %v330 = vmax.f32 %v298, 0.0
        %v331 = vmax.f32 %v299, 0.0
        %v332 = vmax.f32 %v300, 0.0
        %v333 = vpack.c.bf16 %v302, %v301
        %v334 = vpack.c.bf16 %v304, %v303
        %v335 = vpack.c.bf16 %v306, %v305
        %v336 = vpack.c.bf16 %v308, %v307
        %v337 = vpack.c.bf16 %v310, %v309
        %v338 = vpack.c.bf16 %v312, %v311
        %v339 = vpack.c.bf16 %v314, %v313
        %v340 = vpack.c.bf16 %v316, %v315
        %v341 = vpack.c.bf16 %v318, %v317
        %v342 = vpack.c.bf16 %v320, %v319
        %v343 = vpack.c.bf16 %v322, %v321
        %v344 = vpack.c.bf16 %v324, %v323
        %v345 = vpack.c.bf16 %v326, %v325
        %v346 = vpack.c.bf16 %v328, %v327
        %v347 = vpack.c.bf16 %v330, %v329
        %v348 = vpack.c.bf16 %v332, %v331
        %v365 = vunpack.c.l.b16 %v333
        %v366 = vunpack.c.h.b16 %v333
        %v367 = vunpack.c.l.b16 %v334
        %v368 = vunpack.c.h.b16 %v334
        %v369 = vunpack.c.l.b16 %v335
        %v370 = vunpack.c.h.b16 %v335
        %v371 = vunpack.c.l.b16 %v336
        %v372 = vunpack.c.h.b16 %v336
        %v373 = vunpack.c.l.b16 %v337
        %v374 = vunpack.c.h.b16 %v337
        %v375 = vunpack.c.l.b16 %v338
        %v376 = vunpack.c.h.b16 %v338
        %v377 = vunpack.c.l.b16 %v339
        %v378 = vunpack.c.h.b16 %v339
        %v379 = vunpack.c.l.b16 %v340
        %v380 = vunpack.c.h.b16 %v340
        %v381 = vunpack.c.l.b16 %v341
        %v382 = vunpack.c.h.b16 %v341
        %v383 = vunpack.c.l.b16 %v342
        %v384 = vunpack.c.h.b16 %v342
        %v385 = vunpack.c.l.b16 %v343
        %v386 = vunpack.c.h.b16 %v343
        %v387 = vunpack.c.l.b16 %v344
        %v388 = vunpack.c.h.b16 %v344
        %v389 = vunpack.c.l.b16 %v345
        %v390 = vunpack.c.h.b16 %v345
        %v391 = vunpack.c.l.b16 %v346
        %v392 = vunpack.c.h.b16 %v346
        %v393 = vunpack.c.l.b16 %v347
        %v394 = vunpack.c.h.b16 %v347
        %v395 = vunpack.c.l.b16 %v348
        %v396 = vunpack.c.h.b16 %v348
        %v397 = vpack.c.b16 %v365, %v365
        %v398 = vpack.c.b16 %v366, %v366
        %v399 = vpack.c.b16 %v367, %v367
        %v400 = vpack.c.b16 %v368, %v368
        %v401 = vpack.c.b16 %v369, %v369
        %v402 = vpack.c.b16 %v370, %v370
        %v403 = vpack.c.b16 %v371, %v371
        %v404 = vpack.c.b16 %v372, %v372
        %v405 = vpack.c.b16 %v373, %v373
        %v406 = vpack.c.b16 %v374, %v374
        %v407 = vpack.c.b16 %v375, %v375
        %v408 = vpack.c.b16 %v376, %v376
        %v409 = vpack.c.b16 %v377, %v377
        %v410 = vpack.c.b16 %v378, %v378
        %v411 = vpack.c.b16 %v379, %v379
        %v412 = vpack.c.b16 %v380, %v380
        %v413 = vpack.c.b16 %v381, %v381
        %v414 = vpack.c.b16 %v382, %v382
        %v415 = vpack.c.b16 %v383, %v383
        %v416 = vpack.c.b16 %v384, %v384
        %v417 = vpack.c.b16 %v385, %v385
        %v418 = vpack.c.b16 %v386, %v386
        %v419 = vpack.c.b16 %v387, %v387
        %v420 = vpack.c.b16 %v388, %v388
        %v421 = vpack.c.b16 %v389, %v389
        %v422 = vpack.c.b16 %v390, %v390
        %v423 = vpack.c.b16 %v391, %v391
        %v424 = vpack.c.b16 %v392, %v392
        %v425 = vpack.c.b16 %v393, %v393
        %v426 = vpack.c.b16 %v394, %v394
        %v427 = vpack.c.b16 %v395, %v395
        %v428 = vpack.c.b16 %v396, %v396
        %461 = vst [vmem:[%s188] sm:$0xf] %v397
        %462 = vst [vmem:[%s188 + $0x4] sm:$0xf] %v398
        %463 = vst [vmem:[%s188 + $0x8] sm:$0xf] %v399
        %464 = vst [vmem:[%s188 + $0xc] sm:$0xf] %v400
        %465 = vst [vmem:[%s188 + $0x10] sm:$0xf] %v401
        %466 = vst [vmem:[%s188 + $0x14] sm:$0xf] %v402
        %467 = vst [vmem:[%s188 + $0x18] sm:$0xf] %v403
        %468 = vst [vmem:[%s188 + $0x1c] sm:$0xf] %v404
        %469 = vst [vmem:[%s188 + $0x20] sm:$0xf] %v405
        %470 = vst [vmem:[%s188 + $0x24] sm:$0xf] %v406
        %471 = vst [vmem:[%s188 + $0x28] sm:$0xf] %v407
        %472 = vst [vmem:[%s188 + $0x2c] sm:$0xf] %v408
        %473 = vst [vmem:[%s188 + $0x30] sm:$0xf] %v409
        %474 = vst [vmem:[%s188 + $0x34] sm:$0xf] %v410
        %475 = vst [vmem:[%s188 + $0x38] sm:$0xf] %v411
        %476 = vst [vmem:[%s188 + $0x3c] sm:$0xf] %v412
        %477 = vst [vmem:[%s188 + $0x40] sm:$0xf] %v413
        %478 = vst [vmem:[%s188 + $0x44] sm:$0xf] %v414
        %479 = vst [vmem:[%s188 + $0x48] sm:$0xf] %v415
        %480 = vst [vmem:[%s188 + $0x4c] sm:$0xf] %v416
        %481 = vst [vmem:[%s188 + $0x50] sm:$0xf] %v417
        %482 = vst [vmem:[%s188 + $0x54] sm:$0xf] %v418
        %483 = vst [vmem:[%s188 + $0x58] sm:$0xf] %v419
        %484 = vst [vmem:[%s188 + $0x5c] sm:$0xf] %v420
        %485 = vst [vmem:[%s188 + $0x60] sm:$0xf] %v421
        %486 = vst [vmem:[%s188 + $0x64] sm:$0xf] %v422
        %487 = vst [vmem:[%s188 + $0x68] sm:$0xf] %v423
        %488 = vst [vmem:[%s188 + $0x6c] sm:$0xf] %v424
        %489 = vst [vmem:[%s188 + $0x70] sm:$0xf] %v425
        %490 = vst [vmem:[%s188 + $0x74] sm:$0xf] %v426
        %491 = vst [vmem:[%s188 + $0x78] sm:$0xf] %v427
        %492 = vst [vmem:[%s188 + $0x7c] sm:$0xf] %v428
        %s493 = sand.u32 %s96, 1
        %s494 = scalar_lea.sflag [#allocation4], %s493
        %s495 = sand.u32 %s96, 1
        %s496 = smul.addr %s495, 128
        %s497 = scalar_lea.vmem [#allocation5], %s496
        // Predicated region
        $region37: #{tpu_custom_call.1} parent=31 // pred_check
          %p498 = pneg %p106
        $region38: #{tpu_custom_call.1} parent=31 // pred_check_branch
          %500 = sbr.rel (%p498) target = $region40
        $region39: #{tpu_custom_call.1} parent=31 // pred_region
          %s501 = smul.u32 32, %s20
          %s503 = ssub.s32 2048, 2048
          %504 = vsyncadd %s494, %s503
          %s505 = smul.addr %s501, 64
          %s506 = scalar_lea.hbm %s3, %s505
          %s507 = sshll.u32 %s497, 4
          %s508 = int_to_ptr.vmem [resolvable:$true] %s507
          %513 = dma.vmem_to_hbm [thread:$0]  %s508, 2048, %s506, %s494, 64, 64, 4
        $region40: #{tpu_custom_call.1} parent=31 // pred_fallthru
          _
      $region32: #{tpu_custom_call.1} parent=5 // pred_fallthru
        _
      %p514 = scmp.le.s32.totalorder 2, %s15
      // Predicated region
      $region41: #{tpu_custom_call.1} parent=5 // pred_check
        %p515 = pneg %p514
      $region42: #{tpu_custom_call.1} parent=5 // pred_check_branch
        %517 = sbr.rel (%p515) target = $region44
      $region43: #{tpu_custom_call.1} parent=5 // pred_region
        %s518 = ssub.s32 %s15, 2
        // Predicated region
        $region45: #{tpu_custom_call.1} parent=43 // pred_check
          %p519 = pneg %p112
        $region46: #{tpu_custom_call.1} parent=43 // pred_check_branch
          %521 = sbr.rel (%p519) target = $region48
        $region47: #{tpu_custom_call.1} parent=43 // pred_region
          %s522 = sand.u32 %s97, 1
          %s523 = scalar_lea.sflag [#allocation4], %s522
          %s524 = sand.u32 %s97, 1
          %s525 = smul.addr %s524, 128
          %s526 = scalar_lea.vmem [#allocation5], %s525
          %527 = dma.done %s523, 2048
        $region48: #{tpu_custom_call.1} parent=43 // pred_fallthru
          _
      $region44: #{tpu_custom_call.1} parent=5 // pred_fallthru
        _
    $region6: #{tpu_custom_call.1} parent=1 // loop_footer
      %s19 = sadd.s32 1, %s15
    $region7: #{tpu_custom_call.1} parent=1 // loop_footer_branch
      %14 = sbr.rel target = $region3
    $region8: #{tpu_custom_call.1} parent=1 // loop_exit
      _
    %528 = vsyncpa [#allocation3], 1
    %s529 = scalar_lea.sflag [#allocation3], 1
    %530 = vsyncpa %s529, 1
    %531 = vsyncpa [#allocation4], 1
    %s532 = scalar_lea.sflag [#allocation4], 1
    %533 = vsyncpa %s532, 1

</llo_original>
